<compile_context>
chip_gen: v7x
topology: tpu7x:2x2x1
jax: 0.10.0
libtpu: 0.0.40
codegen_flags: <defaults>
</compile_context>

<pallas_src>
import jax
import jax.numpy as jnp
from jax.experimental import pallas as pl
from jax.experimental.pallas import tpu as pltpu


def _round_up(x, m):
    return ((x + m - 1) // m) * m


def _e2t_all_scores_kernel(gamma_ref, ent_ref, m_ref, typT_ref, tsq_ref, out_ref):
    # (TB, E) @ (E, T) -> (TB, T) on the MXU.
    proj = jnp.dot(ent_ref[...], m_ref[...], preferred_element_type=jnp.float32)
    # ||p||^2 per row: (TB, 1)
    p_sq = jnp.sum(proj * proj, axis=1, keepdims=True)
    # <p, t_j> for every type column in this tile: (TB, T) @ (T, TNT) -> (TB, TNT) on the MXU.
    cross = jnp.dot(proj, typT_ref[...], preferred_element_type=jnp.float32)
    # ||p - t||^2 = ||p||^2 - 2<p,t> + ||t||^2 ; clamp tiny negative round-off before sqrt.
    d2 = jnp.maximum(p_sq - 2.0 * cross + tsq_ref[...], 0.0)
    out_ref[...] = gamma_ref[0] - jnp.sqrt(d2)


def e2t_all_type_scores(entity_feat, M, type_emb, gamma):
    """Scores of every entity row against every type row.

    entity_feat : (B, E) f32  (already-gathered entity embeddings)
    M           : (E, T) f32
    type_emb    : (ntype, T) f32
    gamma       : scalar
    returns     : (B, ntype) f32  = gamma - ||entity_feat @ M - type_emb||_2
    """
    B, E = entity_feat.shape
    E2, T = M.shape
    ntype, T2 = type_emb.shape
    assert E == E2 and T == T2

    # --- tile sizing (lane-dense output, fits v7x/v6e/v5e scoped VMEM) -----------------
    B_pad = _round_up(B, 8)
    TB = B_pad if B_pad <= 256 else 256
    B_pad = _round_up(B_pad, TB)

    NT_pad = _round_up(ntype, 128)
    TNT = NT_pad if NT_pad <= 512 else 512
    NT_pad = _round_up(NT_pad, TNT)

    # --- padded / precomputed operands --------------------------------------------------
    ent_pad = jnp.pad(entity_feat.astype(jnp.float32), ((0, B_pad - B), (0, 0)))
    typT_pad = jnp.pad(type_emb.astype(jnp.float32).T, ((0, 0), (0, NT_pad - ntype)))
    tsq = jnp.sum(type_emb.astype(jnp.float32) ** 2, axis=1)[None, :]          # (1, ntype)
    tsq_pad = jnp.pad(tsq, ((0, 0), (0, NT_pad - ntype)))                      # (1, NT_pad)
    gamma_arr = jnp.reshape(jnp.asarray(gamma, dtype=jnp.float32), (1,))

    grid = (B_pad // TB, NT_pad // TNT)

    grid_spec = pltpu.PrefetchScalarGridSpec(
        num_scalar_prefetch=1,                       # gamma -> SMEM
        grid=grid,
        in_specs=[
            pl.BlockSpec((TB, E), lambda i, j, g: (i, 0)),     # entity tile (streamed over i)
            pl.BlockSpec((E, T), lambda i, j, g: (0, 0)),      # M, resident (constant map)
            pl.BlockSpec((T, TNT), lambda i, j, g: (0, j)),    # type table^T, column tiles
            pl.BlockSpec((1, TNT), lambda i, j, g: (0, j)),    # ||t||^2 column tiles
        ],
        out_specs=pl.BlockSpec((TB, TNT), lambda i, j, g: (i, j)),
    )

    out = pl.pallas_call(
        _e2t_all_scores_kernel,
        out_shape=jax.ShapeDtypeStruct((B_pad, NT_pad), jnp.float32),
        grid_spec=grid_spec,
        compiler_params=pltpu.CompilerParams(
            dimension_semantics=("parallel", "parallel"),
            vmem_limit_bytes=32 * 1024 * 1024,
        ),
    )(gamma_arr, ent_pad, M.astype(jnp.float32), typT_pad, tsq_pad)

    return out[:B, :ntype]


@jax.jit
def _forward_scores(entity_embedding, type_embedding, M, gamma, entity_ids, type_ids):
    """entity_ids: (B,), type_ids: (B, N) -> (B, N) scores."""
    ent = jnp.take(entity_embedding, entity_ids, axis=0)                    # (B, E)
    all_scores = e2t_all_type_scores(ent, M, type_embedding, gamma)         # (B, ntype)
    return jnp.take_along_axis(all_scores, type_ids, axis=1)                # (B, N)


class E2TModelJax:
    """JAX/Pallas re-implementation of E2TModel's forward pass."""

    def __init__(self, nentity, ntype, entity_dim, type_dim, gamma, key,
                 double_entity_embedding=False, double_type_embedding=False):
        self.nentity = nentity
        self.ntype = ntype
        self.entity_dim = entity_dim
        self.type_dim = type_dim
        self.epsilon = 2.0
        self.gamma = float(gamma)
        self.gamma_arr = jnp.float32(gamma)
        self.embedding_range = (self.gamma + self.epsilon) / type_dim

        k_ent, k_typ, k_m = jax.random.split(key, 3)
        ent_dim = entity_dim * 2 if double_entity_embedding else entity_dim
        typ_dim = type_dim * 2 if double_type_embedding else type_dim
        r = self.embedding_range
        # Deterministic synthetic parameters (reference inits uniformly in [-r, r]).
        self.entity_embedding = jax.random.uniform(
            k_ent, (nentity, ent_dim), dtype=jnp.float32, minval=-r, maxval=r)
        self.type_embedding = jax.random.uniform(
            k_typ, (ntype, typ_dim), dtype=jnp.float32, minval=-r, maxval=r)
        if double_entity_embedding and double_type_embedding:
            self.M = jax.random.uniform(
                k_m, (2 * entity_dim, 2 * type_dim), dtype=jnp.float32,
                minval=-r, maxval=r)
        else:
            self.M = jax.random.uniform(
                k_m, (entity_dim, type_dim), dtype=jnp.float32, minval=-r, maxval=r)

    def __call__(self, sample, mode="single"):
        if mode == "single":
            # sample: (B, 2) int32 -> entity ids in col 0, type ids in col 1.
            entity_ids = sample[:, 0]
            type_ids = sample[:, 1:2]                  # (B, 1)
        elif mode == "choice_batch":
            entity_part, type_part = sample            # (B, 2), (B, N)
            entity_ids = entity_part[:, 0]
            type_ids = type_part                       # (B, N)
        else:
            raise ValueError("mode %s not supported" % mode)
        return _forward_scores(self.entity_embedding, self.type_embedding,
                               self.M, self.gamma_arr, entity_ids, type_ids)


def _reference_score(entity_feat, type_feat, M, gamma):
    proj = entity_feat @ M
    diff = proj[:, None, :] - type_feat
    return gamma - jnp.sqrt(jnp.sum(diff * diff, axis=2))


if __name__ == "__main__":
    key = jax.random.PRNGKey(0)
    k_model, k_s, k_t, k_n = jax.random.split(key, 4)

    nentity, ntype = 16, 8
    entity_dim, type_dim = 32, 32
    gamma = 12.0
    B, N = 2, 8

    model = E2TModelJax(nentity, ntype, entity_dim, type_dim, gamma, k_model)

    # 'single' mode sample: (B, 2) of (entity_id, type_id)
    single_sample = jnp.stack(
        [jax.random.randint(k_s, (B,), 0, nentity),
         jax.random.randint(k_t, (B,), 0, ntype)], axis=1).astype(jnp.int32)

    # 'choice_batch' mode: positive (B, 2) + negative type ids (B, N)
    neg_types = jax.random.randint(k_n, (B, N), 0, ntype).astype(jnp.int32)

    score_single = model(single_sample, mode="single")                     # (B, 1)
    score_batch = model((single_sample, neg_types), mode="choice_batch")   # (B, N)
    jax.block_until_ready(score_single)
    jax.block_until_ready(score_batch)

    # Cross-check against a pure-JAX reference (direct broadcast-subtract formula).
    ent_f = jnp.take(model.entity_embedding, single_sample[:, 0], axis=0)
    typ_f1 = jnp.take(model.type_embedding, single_sample[:, 1], axis=0)[:, None, :]
    typ_fN = jnp.take(model.type_embedding, neg_types.reshape(-1), axis=0).reshape(B, N, -1)
    ref_single = _reference_score(ent_f, typ_f1, model.M, model.gamma)
    ref_batch = _reference_score(ent_f, typ_fN, model.M, model.gamma)

    assert score_single.shape == (B, 1)
    assert score_batch.shape == (B, N)
    assert jnp.allclose(score_single, ref_single, atol=1e-4, rtol=1e-4)
    assert jnp.allclose(score_batch, ref_batch, atol=1e-4, rtol=1e-4)

    # TODO(synk): train_step/test_step (loss, ranking metrics, DataLoader plumbing) are
    # host-side utilities and are intentionally not ported to Pallas.

    print("KERNEL_OK")
</pallas_src>

<mosaic_0001>
module attributes {stable_mosaic.version = 11 : i64} {
  func.func @_e2t_all_scores_kernel(%arg0: i32, %arg1: i32, %arg2: memref<1xf32, #tpu.memory_space<smem>>, %arg3: memref<8x32xf32, #tpu.memory_space<vmem>>, %arg4: memref<32x32xf32, #tpu.memory_space<vmem>>, %arg5: memref<32x128xf32, #tpu.memory_space<vmem>>, %arg6: memref<1x128xf32, #tpu.memory_space<vmem>>, %arg7: memref<8x128xf32, #tpu.memory_space<vmem>>) attributes {dimension_semantics = [#tpu.dimension_semantics<parallel>, #tpu.dimension_semantics<parallel>], iteration_bounds = array<i64: 1, 1>, scalar_prefetch = 1 : i64, scratch_operands = 0 : i64, tpu.core_type = #tpu.core_type<tc>, window_params = [{transform_indices = @transform_0, window_bounds = array<i64: 8, 32>}, {pipeline_mode = #tpu.pipeline_mode<synchronous>, transform_indices = @transform_1, window_bounds = array<i64: 32, 32>}, {transform_indices = @transform_2, window_bounds = array<i64: 32, 128>}, {transform_indices = @transform_3, window_bounds = array<i64: 1, 128>}, {transform_indices = @transform_4, window_bounds = array<i64: 8, 128>}]} {
    %c0 = arith.constant 0 : index
    %c0_0 = arith.constant 0 : index
    %0 = vector.load %arg3[%c0, %c0_0] : memref<8x32xf32, #tpu.memory_space<vmem>>, vector<8x32xf32>
    %c0_1 = arith.constant 0 : index
    %c0_2 = arith.constant 0 : index
    %1 = vector.load %arg4[%c0_1, %c0_2] : memref<32x32xf32, #tpu.memory_space<vmem>>, vector<32x32xf32>
    %cst = arith.constant dense<0.000000e+00> : vector<8x32xf32>
    %2 = tpu.matmul %0, %1, %cst {dimension_numbers = #tpu.dot_dimension_numbers<[1], [0], [0], [1], [0, 0, 1, 1], [], []>} : vector<8x32xf32>, vector<32x32xf32>, vector<8x32xf32> -> vector<8x32xf32>
    %3 = arith.mulf %2, %2 : vector<8x32xf32>
    %cst_3 = arith.constant dense<0.000000e+00> : vector<8xf32>
    %4 = vector.multi_reduction <add>, %3, %cst_3 [1] : vector<8x32xf32> to vector<8xf32>
    %5 = vector.shape_cast %4 : vector<8xf32> to vector<8x1xf32>
    %c0_4 = arith.constant 0 : index
    %c0_5 = arith.constant 0 : index
    %6 = vector.load %arg5[%c0_4, %c0_5] : memref<32x128xf32, #tpu.memory_space<vmem>>, vector<32x128xf32>
    %cst_6 = arith.constant dense<0.000000e+00> : vector<8x128xf32>
    %7 = tpu.matmul %2, %6, %cst_6 {dimension_numbers = #tpu.dot_dimension_numbers<[1], [0], [0], [1], [0, 0, 1, 1], [], []>} : vector<8x32xf32>, vector<32x128xf32>, vector<8x128xf32> -> vector<8x128xf32>
    %cst_7 = arith.constant 2.000000e+00 : f32
    %8 = vector.broadcast %cst_7 : f32 to vector<8x128xf32>
    %9 = arith.mulf %8, %7 : vector<8x128xf32>
    %10 = vector.broadcast %5 : vector<8x1xf32> to vector<8x128xf32>
    %11 = arith.subf %10, %9 : vector<8x128xf32>
    %c0_8 = arith.constant 0 : index
    %c0_9 = arith.constant 0 : index
    %12 = vector.load %arg6[%c0_8, %c0_9] : memref<1x128xf32, #tpu.memory_space<vmem>>, vector<1x128xf32>
    %13 = vector.broadcast %12 : vector<1x128xf32> to vector<8x128xf32>
    %14 = arith.addf %11, %13 : vector<8x128xf32>
    %cst_10 = arith.constant 0.000000e+00 : f32
    %15 = vector.broadcast %cst_10 : f32 to vector<8x128xf32>
    %16 = arith.maximumf %14, %15 : vector<8x128xf32>
    %c0_11 = arith.constant 0 : index
    %17 = memref.load %arg2[%c0_11] : memref<1xf32, #tpu.memory_space<smem>>
    %18 = math.sqrt %16 : vector<8x128xf32>
    %19 = vector.broadcast %17 : f32 to vector<8x128xf32>
    %20 = arith.subf %19, %18 : vector<8x128xf32>
    %c0_12 = arith.constant 0 : index
    %c0_13 = arith.constant 0 : index
    %21 = vector.load %arg7[%c0_12, %c0_13] : memref<8x128xf32, #tpu.memory_space<vmem>>, vector<8x128xf32>
    tpu.vector_store %arg7[%c0_12, %c0_13], %20 {strides = array<i32>} : memref<8x128xf32, #tpu.memory_space<vmem>>, vector<8x128xf32>,
    return
  }
  func.func @transform_0(%arg0: i32, %arg1: i32, %arg2: memref<1xf32, #tpu.memory_space<smem>>) -> (i32, i32) {
    %c0_i32 = arith.constant 0 : i32
    %c0_i32_0 = arith.constant 0 : i32
    return %arg0, %c0_i32 : i32, i32
  }
  func.func @transform_1(%arg0: i32, %arg1: i32, %arg2: memref<1xf32, #tpu.memory_space<smem>>) -> (i32, i32) {
    %c0_i32 = arith.constant 0 : i32
    %c0_i32_0 = arith.constant 0 : i32
    %c0_i32_1 = arith.constant 0 : i32
    return %c0_i32, %c0_i32_0 : i32, i32
  }
  func.func @transform_2(%arg0: i32, %arg1: i32, %arg2: memref<1xf32, #tpu.memory_space<smem>>) -> (i32, i32) {
    %c0_i32 = arith.constant 0 : i32
    %c0_i32_0 = arith.constant 0 : i32
    return %c0_i32, %arg1 : i32, i32
  }
  func.func @transform_3(%arg0: i32, %arg1: i32, %arg2: memref<1xf32, #tpu.memory_space<smem>>) -> (i32, i32) {
    %c0_i32 = arith.constant 0 : i32
    %c0_i32_0 = arith.constant 0 : i32
    return %c0_i32, %arg1 : i32, i32
  }
  func.func @transform_4(%arg0: i32, %arg1: i32, %arg2: memref<1xf32, #tpu.memory_space<smem>>) -> (i32, i32) {
    %c0_i32 = arith.constant 0 : i32
    return %arg0, %arg1 : i32, i32
  }
}

</mosaic_0001>

<llo_original>
// kernel: _forward_scores.1
$region0: #{_forward_scores.1}
  #allocation0 [shape = 'u32[]', space=smem, size = 0x4, offset = 0x4, fixed_abs, tag = 'smem constant byte address 0x4 - core index']
  #allocation1 [shape = 'u32[144,128]{1,0:T(1,128)}', space=vmem, size = 0x12000, scoped, tag = 'internal scratch']
  #allocation2 [shape = 's32[1]{0}', space=sflag, size = 0x4, scoped, tag = 'scoped memory for _forward_scores.1']
  #allocation3 [shape = 'f32[1]{0:T(128)S(6)}', space=smem, size = 0x200, scoped, tag = 'prefetched SMEM operand 0']
  %s0 = inlined_call_operand.<no memory space> [shape: f32[1], index: 0, kind: input, shape index: {}]
  %s1 = inlined_call_operand.vmem [shape: f32[8,32], index: 1, kind: input, shape index: {}]
  %s2 = inlined_call_operand.vmem [shape: f32[32,32], index: 2, kind: input, shape index: {}]
  %s3 = inlined_call_operand.vmem [shape: f32[32,128], index: 3, kind: input, shape index: {}]
  %s4 = inlined_call_operand.vmem [shape: f32[1,128], index: 4, kind: input, shape index: {}]
  %s5 = inlined_call_operand.vmem [shape: f32[8,128], index: 5, kind: output, shape index: {}]
  %s6 = sld [smem:[#allocation0]]
  $region26: #{_forward_scores.1} parent=0
    _
  %s8 = ssub.s32 1, %s6
  %s9 = scalar_select 0, %s8, %s6
  %10 = sst [smem:[#allocation3]] %s0
  // Predicated region
  $region2: #{_forward_scores.1} parent=0 // pred_check
    _
  $region3: #{_forward_scores.1} parent=0 // pred_check_branch
    %12 = sbr.rel (0) target = $region5
  $region4: #{_forward_scores.1} parent=0 // pred_region
    _
  $region5: #{_forward_scores.1} parent=0 // pred_fallthru
    _
  // Predicated region
  $region6: #{_forward_scores.1} parent=0 // pred_check
    _
  $region7: #{_forward_scores.1} parent=0 // pred_check_branch
    %14 = sbr.rel (0) target = $region9
  $region8: #{_forward_scores.1} parent=0 // pred_region
    _
  $region9: #{_forward_scores.1} parent=0 // pred_fallthru
    _
  // Predicated region
  $region10: #{_forward_scores.1} parent=0 // pred_check
    _
  $region11: #{_forward_scores.1} parent=0 // pred_check_branch
    %16 = sbr.rel (0) target = $region13
  $region12: #{_forward_scores.1} parent=0 // pred_region
    _
  $region13: #{_forward_scores.1} parent=0 // pred_fallthru
    _
  // Predicated region
  $region14: #{_forward_scores.1} parent=0 // pred_check
    _
  $region15: #{_forward_scores.1} parent=0 // pred_check_branch
    %18 = sbr.rel (0) target = $region17
  $region16: #{_forward_scores.1} parent=0 // pred_region
    _
  $region17: #{_forward_scores.1} parent=0 // pred_fallthru
    _
  %v19 = vld [vmem:[%s1] sm:$0xff]
  %v20 = vld [vmem:[%s2] sm:$0xff]
  %v21 = vld [vmem:[%s2 + $0x8] sm:$0xff]
  %v22 = vld [vmem:[%s2 + $0x10] sm:$0xff]
  %v23 = vld [vmem:[%s2 + $0x18] sm:$0xff]
  %vm24 = vcmask 261120
  %v26 = vsel %vm24, %v19, 0
  %28 = vmatprep.subr.mxu0 0.0
  %29 = vmatpush1.msra.mxu0 %v20
  %30 = vmatprep.subr.mxu0 0.0
  %31 = vmatpush1.msra.mxu0 %v21
  %32 = vmatprep.subr.mxu0 0.0
  %33 = vmatpush1.msra.mxu0 %v22
  %34 = vmatprep.subr.mxu0 0.0
  %35 = vmatpush1.msra.mxu0 %v23
  %36 = vmatprep.subr.mxu0 0.0
  %37 = vmatpush1.msra.mxu0 0.0
  %38 = vmatprep.subr.mxu0 0.0
  %39 = vmatpush1.msra.mxu0 0.0
  %40 = vmatprep.subr.mxu0 0.0
  %41 = vmatpush1.msra.mxu0 0.0
  %42 = vmatprep.subr.mxu0 0.0
  %43 = vmatpush1.msra.mxu0 0.0
  %44 = vmatprep.subr.mxu0 0.0
  %45 = vmatpush1.msra.mxu0 0.0
  %46 = vmatprep.subr.mxu0 0.0
  %47 = vmatpush1.msra.mxu0 0.0
  %48 = vmatprep.subr.mxu0 0.0
  %49 = vmatpush1.msra.mxu0 0.0
  %50 = vmatprep.subr.mxu0 0.0
  %51 = vmatpush1.msra.mxu0 0.0
  %52 = vmatprep.subr.mxu0 0.0
  %53 = vmatpush1.msra.mxu0 0.0
  %54 = vmatprep.subr.mxu0 0.0
  %55 = vmatpush1.msra.mxu0 0.0
  %56 = vmatprep.subr.mxu0 0.0
  %57 = vmatpush1.msra.mxu0 0.0
  %58 = vmatprep.subr.mxu0 0.0
  %59 = vmatpush1.msra.mxu0 0.0
  %60 = vmatprep.subr.mxu0 0.0
  %61 = vmatpush1.msra.mxu0 0.0
  %62 = vmatprep.subr.mxu0 0.0
  %63 = vmatpush1.msra.mxu0 0.0
  %64 = vmatprep.subr.mxu0 0.0
  %65 = vmatpush1.msra.mxu0 0.0
  %66 = vmatprep.subr.mxu0 0.0
  %67 = vmatpush1.msra.mxu0 0.0
  %68 = vmatprep.subr.mxu0 0.0
  %69 = vmatpush1.msra.mxu0 0.0
  %70 = vmatprep.subr.mxu0 0.0
  %71 = vmatpush1.msra.mxu0 0.0
  %72 = vmatprep.subr.mxu0 0.0
  %73 = vmatpush1.msra.mxu0 0.0
  %74 = vmatprep.subr.mxu0 0.0
  %75 = vmatpush1.msra.mxu0 0.0
  %76 = vmatprep.subr.mxu0 0.0
  %77 = vmatpush1.msra.mxu0 0.0
  %78 = vmatprep.subr.mxu0 0.0
  %79 = vmatpush1.msra.mxu0 0.0
  %80 = vmatprep.subr.mxu0 0.0
  %81 = vmatpush1.msra.mxu0 0.0
  %82 = vmatprep.subr.mxu0 0.0
  %83 = vmatpush1.msra.mxu0 0.0
  %84 = vmatprep.subr.mxu0 0.0
  %85 = vmatpush1.msra.mxu0 0.0
  %86 = vmatprep.subr.mxu0 0.0
  %87 = vmatpush1.msra.mxu0 0.0
  %88 = vmatprep.subr.mxu0 0.0
  %89 = vmatpush1.msra.mxu0 0.0
  %90 = vmatprep.subr.mxu0 0.0
  %91 = vmatpush1.msra.mxu0 0.0
  %92 = vmatprep.mubr.f32.mxu0 0.0
  %93 = vmatmul.mubr.f32.gmra.mrb[0].mxu0 %v26
  %v94 = vpop.f32.mrb[0].mxu0
  %v95 = vadd.f32 0.0, %v94
  %v96 = vpop.f32.mrb[0].mxu0
  %97 = vdwg.mxu0
  %v98 = vmul.f32 %v95, %v95
  %v99 = vsel %vm24, %v98, 0.0
  %100 = vadd.xlane.f32.xlu0 %v99
  %v101 = vpop.xlane.xlu0 %100
  %v102 = vld [vmem:[%s3] sm:$0xff]
  %v103 = vld [vmem:[%s3 + $0x8] sm:$0xff]
  %v104 = vld [vmem:[%s3 + $0x10] sm:$0xff]
  %v105 = vld [vmem:[%s3 + $0x18] sm:$0xff]
  %v107 = vsel %vm24, %v95, 0
  %109 = vmatprep.subr.mxu0 0.0
  %110 = vmatpush1.msra.mxu0 %v102
  %111 = vmatprep.subr.mxu0 0.0
  %112 = vmatpush1.msra.mxu0 %v103
  %113 = vmatprep.subr.mxu0 0.0
  %114 = vmatpush1.msra.mxu0 %v104
  %115 = vmatprep.subr.mxu0 0.0
  %116 = vmatpush1.msra.mxu0 %v105
  %117 = vmatprep.subr.mxu0 0.0
  %118 = vmatpush1.msra.mxu0 0.0
  %119 = vmatprep.subr.mxu0 0.0
  %120 = vmatpush1.msra.mxu0 0.0
  %121 = vmatprep.subr.mxu0 0.0
  %122 = vmatpush1.msra.mxu0 0.0
  %123 = vmatprep.subr.mxu0 0.0
  %124 = vmatpush1.msra.mxu0 0.0
  %125 = vmatprep.subr.mxu0 0.0
  %126 = vmatpush1.msra.mxu0 0.0
  %127 = vmatprep.subr.mxu0 0.0
  %128 = vmatpush1.msra.mxu0 0.0
  %129 = vmatprep.subr.mxu0 0.0
  %130 = vmatpush1.msra.mxu0 0.0
  %131 = vmatprep.subr.mxu0 0.0
  %132 = vmatpush1.msra.mxu0 0.0
  %133 = vmatprep.subr.mxu0 0.0
  %134 = vmatpush1.msra.mxu0 0.0
  %135 = vmatprep.subr.mxu0 0.0
  %136 = vmatpush1.msra.mxu0 0.0
  %137 = vmatprep.subr.mxu0 0.0
  %138 = vmatpush1.msra.mxu0 0.0
  %139 = vmatprep.subr.mxu0 0.0
  %140 = vmatpush1.msra.mxu0 0.0
  %141 = vmatprep.subr.mxu0 0.0
  %142 = vmatpush1.msra.mxu0 0.0
  %143 = vmatprep.subr.mxu0 0.0
  %144 = vmatpush1.msra.mxu0 0.0
  %145 = vmatprep.subr.mxu0 0.0
  %146 = vmatpush1.msra.mxu0 0.0
  %147 = vmatprep.subr.mxu0 0.0
  %148 = vmatpush1.msra.mxu0 0.0
  %149 = vmatprep.subr.mxu0 0.0
  %150 = vmatpush1.msra.mxu0 0.0
  %151 = vmatprep.subr.mxu0 0.0
  %152 = vmatpush1.msra.mxu0 0.0
  %153 = vmatprep.subr.mxu0 0.0
  %154 = vmatpush1.msra.mxu0 0.0
  %155 = vmatprep.subr.mxu0 0.0
  %156 = vmatpush1.msra.mxu0 0.0
  %157 = vmatprep.subr.mxu0 0.0
  %158 = vmatpush1.msra.mxu0 0.0
  %159 = vmatprep.subr.mxu0 0.0
  %160 = vmatpush1.msra.mxu0 0.0
  %161 = vmatprep.subr.mxu0 0.0
  %162 = vmatpush1.msra.mxu0 0.0
  %163 = vmatprep.subr.mxu0 0.0
  %164 = vmatpush1.msra.mxu0 0.0
  %165 = vmatprep.subr.mxu0 0.0
  %166 = vmatpush1.msra.mxu0 0.0
  %167 = vmatprep.subr.mxu0 0.0
  %168 = vmatpush1.msra.mxu0 0.0
  %169 = vmatprep.subr.mxu0 0.0
  %170 = vmatpush1.msra.mxu0 0.0
  %171 = vmatprep.subr.mxu0 0.0
  %172 = vmatpush1.msra.mxu0 0.0
  %173 = vmatprep.mubr.f32.mxu0 0.0
  %174 = vmatmul.mubr.f32.gmra.mrb[0].mxu0 %v107
  %v175 = vpop.f32.mrb[0].mxu0
  %v176 = vadd.f32 0.0, %v175
  %v177 = vpop.f32.mrb[0].mxu0
  %178 = vdwg.mxu0
  %v179 = vmul.f32 %v176, 2.0
  %v180 = vsub.f32 %v101, %v179
  %v181 = vld [vmem:[%s4] sm:$0x1]
  %v183 = vlaneseq
  %v184 = vshrl.u32 %v183, 7
  %v185 = vsub.s32 0, %v184
  %v186 = vrot.slane %v181, %v185
  %v188 = vadd.f32 %v180, %v186
  %v189 = vmax.f32 %v188, 0.0
  %s190 = sld [smem:[#allocation3]]
  %v191 = vrsqrt.pop %v189
  %v192 = vmul.f32 %v189, %v191
  %vm193 = vcmp.eq.f32.partialorder %v189, inf
  %v194 = vsel %vm193, %v189, %v192
  %vm195 = vcmp.eq.f32.partialorder %v189, 0.0
  %v196 = vand.u32 %v189, 2147483648
  %v197 = vsel %vm195, %v196, %v194
  %v198 = vstv %s190
  %v199 = vsub.f32 %v198, %v197
  %200 = vst [vmem:[%s5] sm:$0xff] %v199
  // Predicated region
  $region18: #{_forward_scores.1} parent=0 // pred_check
    _
  $region19: #{_forward_scores.1} parent=0 // pred_check_branch
    %202 = sbr.rel (0) target = $region21
  $region20: #{_forward_scores.1} parent=0 // pred_region
    _
  $region21: #{_forward_scores.1} parent=0 // pred_fallthru
    _
  // Predicated region
  $region22: #{_forward_scores.1} parent=0 // pred_check
    _
  $region23: #{_forward_scores.1} parent=0 // pred_check_branch
    %204 = sbr.rel (0) target = $region25
  $region24: #{_forward_scores.1} parent=0 // pred_region
    _
  $region25: #{_forward_scores.1} parent=0 // pred_fallthru
    _

</llo_original>
